<compile_context>
chip_gen: v7x
topology: tpu7x:2x2x1
jax: 0.10.0
libtpu: 0.0.40
codegen_flags: <defaults>
</compile_context>

<pallas_src>
import jax
import jax.numpy as jnp
from jax.experimental import pallas as pl
from jax.experimental.pallas import tpu as pltpu


def _highway_kernel(x_ref, w_ref, b_ref, o_ref):
    """One grid step = LB highway layers on one (bm, D) batch tile.

    o_ref is the resident state: its output block index is constant across the
    (sequential) layer-block grid axis, so the state stays in VMEM.
    w_ref: (LB, D, 2D) bf16 fused weights; b_ref: (LB, 1, 2D) f32 fused bias.
    """
    lb = pl.program_id(1)

    @pl.when(lb == 0)
    def _():
        o_ref[...] = x_ref[...]

    D = o_ref.shape[1]
    LB = w_ref.shape[0]

    def layer_body(i, x):
        xb = x.astype(jnp.bfloat16)                      # MXU-native LHS
        # One fused (bm, D) @ (D, 2D) matmul, f32 accumulation on the MXU.
        hg = jnp.dot(xb, w_ref[i], preferred_element_type=jnp.float32) + b_ref[i]
        new_x = jnp.maximum(hg[:, :D], 0.0)              # ReLU branch
        gate = jax.nn.sigmoid(hg[:, D:])                 # gate branch (EUP)
        return new_x + gate * (x - new_x)                # == gate*x + (1-gate)*new_x

    x = o_ref[...]                                       # (bm, D) f32 resident state
    x = jax.lax.fori_loop(0, LB, layer_body, x, unroll=True)
    o_ref[...] = x


def _pick_bm(B_pad):
    """Batch-tile size: large for arithmetic intensity, >=2 tiles for v7x megacore."""
    if B_pad >= 1024:
        return 512
    if B_pad >= 16:
        return max(8, ((B_pad // 2) // 8) * 8)   # give both TensorCores work
    return max(8, B_pad)


def highway_forward(x, w, b, *, bm=None):
    """x: (B, D) f32; w: (L, D, 2D) bf16 fused weights; b: (L, 1, 2D) f32 fused bias."""
    B, D = x.shape
    L = w.shape[0]

    # --- batch tiling (zero-pad ragged batches instead of asserting) ---------
    B8 = ((B + 7) // 8) * 8
    if bm is None:
        bm = _pick_bm(B8)
    bm = max(8, (bm // 8) * 8)
    B_pad = ((B8 + bm - 1) // bm) * bm
    if B_pad != B:
        x = jnp.pad(x, ((0, B_pad - B), (0, 0)))
    m_tiles = B_pad // bm

    # --- layer blocking: keep as many layers resident in VMEM as possible ----
    per_layer_bytes = 2 * (D * 2 * D * 2 + 8 * 2 * D * 4)   # dbl-buffered bf16 W + padded f32 b
    weight_budget = 20 << 20                                 # safe even on v7x (64 MiB VMEM)
    LB = 1
    for cand in range(L, 0, -1):
        if L % cand == 0 and cand * per_layer_bytes <= weight_budget:
            LB = cand
            break
    n_lblocks = L // LB
    resident = (n_lblocks == 1)   # constant weight index_map -> weights DMA'd once

    # --- scoped VMEM limit derived from the chip's real capacity -------------
    need = (LB * per_layer_bytes            # weights + biases (double-buffered)
            + 2 * 2 * bm * D * 4            # x + out tiles, double-buffered f32
            + (4 << 20))                    # headroom for internal scratch
    try:
        cap = pltpu.get_tpu_info().vmem_capacity_bytes
    except Exception:
        cap = 64 << 20                      # conservative fallback (v7x per-TC)
    vmem_limit = int(min(int(cap * 0.85), max(32 << 20, need)))

    weight_layer_fetches = L if resident else m_tiles * L
    cost = pl.CostEstimate(
        flops=4 * B_pad * D * D * L,                             # (bm,D)x(D,2D) per layer
        transcendentals=B_pad * D * L,                           # sigmoid
        bytes_accessed=(weight_layer_fetches * (2 * D * D * 2 + 2 * D * 4)
                        + 2 * B_pad * D * 4),
    )

    out = pl.pallas_call(
        _highway_kernel,
        out_shape=jax.ShapeDtypeStruct((B_pad, D), x.dtype),
        grid_spec=pltpu.PrefetchScalarGridSpec(
            num_scalar_prefetch=0,
            grid=(m_tiles, n_lblocks),
            in_specs=[
                pl.BlockSpec((bm, D), lambda m, l: (m, 0)),          # x tile
                pl.BlockSpec((LB, D, 2 * D), lambda m, l: (l, 0, 0)),  # fused W (bf16)
                pl.BlockSpec((LB, 1, 2 * D), lambda m, l: (l, 0, 0)),  # fused bias (f32)
            ],
            out_specs=pl.BlockSpec((bm, D), lambda m, l: (m, 0)),    # resident state
        ),
        compiler_params=pltpu.CompilerParams(
            dimension_semantics=("parallel", "arbitrary"),  # batch parallel, layers sequential
            vmem_limit_bytes=vmem_limit,
        ),
        cost_estimate=cost,
    )(x, w, b)

    return out[:B] if B_pad != B else out
    # TODO(synk): for D >= ~2048 add an N-tiling grid axis on the weight columns
    # (tn ~512) so double-buffering survives the v7x 64 MiB VMEM.


def make_params(key, input_dim, layers):
    """Deterministic init mirroring Highway.reset_parameters().

    Returns fused f32 master weights w (L, D, 2D) and biases b (L, 1, 2D):
    columns [:D] = new_x branch (bias 0), columns [D:] = gate branch (bias 1).
    """
    D = input_dim
    w_list = []
    for _ in range(layers):
        key, sub = jax.random.split(key)
        wt = 0.02 * jax.random.normal(sub, (2 * D, D), jnp.float32)  # torch layout (2D, D)
        w_list.append(wt.T)                                          # (D, 2D) = W.T
    w = jnp.stack(w_list, axis=0)                                    # (L, D, 2D)
    b = jnp.concatenate(
        [jnp.zeros((layers, 1, D), jnp.float32),                     # bias[:D] = 0 (new_x)
         jnp.ones((layers, 1, D), jnp.float32)], axis=-1)            # bias[D:] = 1 (gate)
    return w, b


def highway_reference_bf16(x, w_bf16, b):
    """Pure-JAX reference mirroring the kernel's bf16-weight numerics."""
    D = x.shape[-1]
    for l in range(w_bf16.shape[0]):
        hg = jnp.dot(x.astype(jnp.bfloat16), w_bf16[l],
                     preferred_element_type=jnp.float32) + b[l]
        new_x = jax.nn.relu(hg[:, :D])
        gate = jax.nn.sigmoid(hg[:, D:])
        x = gate * x + (1.0 - gate) * new_x
    return x


def highway_reference_f32(x, w, b):
    """Pure-JAX f32 reference matching the PyTorch forward exactly."""
    D = x.shape[-1]
    for l in range(w.shape[0]):
        hg = x @ w[l] + b[l]
        new_x = jax.nn.relu(hg[:, :D])
        gate = jax.nn.sigmoid(hg[:, D:])
        x = gate * x + (1.0 - gate) * new_x
    return x


if __name__ == "__main__":
    B, D, L = 8, 128, 2  # small: batch=8, hidden=128, 2 highway layers

    key = jax.random.PRNGKey(0)
    kx, kp = jax.random.split(key)
    x = jax.random.normal(kx, (B, D), jnp.float32)

    w_f32, b = make_params(kp, D, L)
    w = w_f32.astype(jnp.bfloat16)   # stream weights in bf16 (weight-bandwidth-bound)

    out = highway_forward(x, w, b)
    out = jax.block_until_ready(out)

    assert out.shape == (B, D) and out.dtype == jnp.float32

    ref_bf16 = highway_reference_bf16(x, w, b)
    ref_f32 = highway_reference_f32(x, w_f32, b)
    assert jnp.allclose(out, ref_bf16, atol=1e-3, rtol=1e-3), "mismatch vs bf16 reference"
    assert jnp.allclose(out, ref_f32, atol=3e-2, rtol=3e-2), "mismatch vs f32 reference"

    print("KERNEL_OK")
</pallas_src>

<mosaic_0001>
module attributes {stable_mosaic.version = 11 : i64} {
  func.func @_highway_kernel(%arg0: i32, %arg1: i32, %arg2: memref<8x128xf32, #tpu.memory_space<vmem>>, %arg3: memref<2x128x256xbf16, #tpu.memory_space<vmem>>, %arg4: memref<2x1x256xf32, #tpu.memory_space<vmem>>, %arg5: memref<8x128xf32, #tpu.memory_space<vmem>>) attributes {dimension_semantics = [#tpu.dimension_semantics<parallel>, #tpu.dimension_semantics<arbitrary>], iteration_bounds = array<i64: 1, 1>, scalar_prefetch = 0 : i64, scratch_operands = 0 : i64, tpu.core_type = #tpu.core_type<tc>, window_params = [{transform_indices = @transform_0, window_bounds = array<i64: 8, 128>}, {transform_indices = @transform_1, window_bounds = array<i64: 2, 128, 256>}, {transform_indices = @transform_2, window_bounds = array<i64: 2, 1, 256>}, {transform_indices = @transform_3, window_bounds = array<i64: 8, 128>}]} {
    %c0_i32 = arith.constant 0 : i32
    %0 = arith.cmpi eq, %arg1, %c0_i32 : i32
    %1 = arith.extui %0 : i1 to i32
    %c0_i32_0 = arith.constant 0 : i32
    %2 = arith.cmpi ne, %1, %c0_i32_0 : i32
    scf.if %2 {
      %c0_18 = arith.constant 0 : index
      %c0_19 = arith.constant 0 : index
      %49 = vector.load %arg2[%c0_18, %c0_19] : memref<8x128xf32, #tpu.memory_space<vmem>>, vector<8x128xf32>
      %c0_20 = arith.constant 0 : index
      %c0_21 = arith.constant 0 : index
      %50 = vector.load %arg5[%c0_20, %c0_21] : memref<8x128xf32, #tpu.memory_space<vmem>>, vector<8x128xf32>
      tpu.vector_store %arg5[%c0_20, %c0_21], %49 {strides = array<i32>} : memref<8x128xf32, #tpu.memory_space<vmem>>, vector<8x128xf32>,
    } else {
    }
    %c0 = arith.constant 0 : index
    %c0_1 = arith.constant 0 : index
    %3 = vector.load %arg5[%c0, %c0_1] : memref<8x128xf32, #tpu.memory_space<vmem>>, vector<8x128xf32>
    %c0_i32_2 = arith.constant 0 : i32
    %4 = arith.truncf %3 : vector<8x128xf32> to vector<8x128xbf16>
    %5 = arith.index_cast %c0_i32_2 : i32 to index
    %c0_3 = arith.constant 0 : index
    %c0_4 = arith.constant 0 : index
    %6 = vector.load %arg3[%5, %c0_3, %c0_4] : memref<2x128x256xbf16, #tpu.memory_space<vmem>>, vector<1x128x256xbf16>
    %7 = vector.shape_cast %6 : vector<1x128x256xbf16> to vector<128x256xbf16>
    %cst = arith.constant dense<0.000000e+00> : vector<8x256xf32>
    %8 = tpu.matmul %4, %7, %cst {dimension_numbers = #tpu.dot_dimension_numbers<[1], [0], [0], [1], [0, 0, 1, 1], [], []>} : vector<8x128xbf16>, vector<128x256xbf16>, vector<8x256xf32> -> vector<8x256xf32>
    %9 = arith.index_cast %c0_i32_2 : i32 to index
    %c0_5 = arith.constant 0 : index
    %c0_6 = arith.constant 0 : index
    %10 = vector.load %arg4[%9, %c0_5, %c0_6] : memref<2x1x256xf32, #tpu.memory_space<vmem>>, vector<1x1x256xf32>
    %11 = vector.shape_cast %10 : vector<1x1x256xf32> to vector<1x256xf32>
    %12 = vector.broadcast %11 : vector<1x256xf32> to vector<8x256xf32>
    %13 = arith.addf %8, %12 : vector<8x256xf32>
    %14 = vector.extract_strided_slice %13 {offsets = [0, 0], sizes = [8, 128], strides = [1, 1]} : vector<8x256xf32> to vector<8x128xf32>
    %cst_7 = arith.constant 0.000000e+00 : f32
    %15 = vector.broadcast %cst_7 : f32 to vector<8x128xf32>
    %16 = arith.maximumf %14, %15 : vector<8x128xf32>
    %17 = vector.extract_strided_slice %13 {offsets = [0, 128], sizes = [8, 128], strides = [1, 1]} : vector<8x256xf32> to vector<8x128xf32>
    %18 = arith.negf %17 : vector<8x128xf32>
    %19 = math.exp %18 : vector<8x128xf32>
    %cst_8 = arith.constant 1.000000e+00 : f32
    %20 = vector.broadcast %cst_8 : f32 to vector<8x128xf32>
    %21 = arith.addf %20, %19 : vector<8x128xf32>
    %22 = arith.divf %20, %21 : vector<8x128xf32>
    %23 = arith.subf %3, %16 : vector<8x128xf32>
    %24 = arith.mulf %22, %23 : vector<8x128xf32>
    %25 = arith.addf %16, %24 : vector<8x128xf32>
    %c1_i32 = arith.constant 1 : i32
    %26 = arith.truncf %25 : vector<8x128xf32> to vector<8x128xbf16>
    %27 = arith.index_cast %c1_i32 : i32 to index
    %c0_9 = arith.constant 0 : index
    %c0_10 = arith.constant 0 : index
    %28 = vector.load %arg3[%27, %c0_9, %c0_10] : memref<2x128x256xbf16, #tpu.memory_space<vmem>>, vector<1x128x256xbf16>
    %29 = vector.shape_cast %28 : vector<1x128x256xbf16> to vector<128x256xbf16>
    %cst_11 = arith.constant dense<0.000000e+00> : vector<8x256xf32>
    %30 = tpu.matmul %26, %29, %cst_11 {dimension_numbers = #tpu.dot_dimension_numbers<[1], [0], [0], [1], [0, 0, 1, 1], [], []>} : vector<8x128xbf16>, vector<128x256xbf16>, vector<8x256xf32> -> vector<8x256xf32>
    %31 = arith.index_cast %c1_i32 : i32 to index
    %c0_12 = arith.constant 0 : index
    %c0_13 = arith.constant 0 : index
    %32 = vector.load %arg4[%31, %c0_12, %c0_13] : memref<2x1x256xf32, #tpu.memory_space<vmem>>, vector<1x1x256xf32>
    %33 = vector.shape_cast %32 : vector<1x1x256xf32> to vector<1x256xf32>
    %34 = vector.broadcast %33 : vector<1x256xf32> to vector<8x256xf32>
    %35 = arith.addf %30, %34 : vector<8x256xf32>
    %36 = vector.extract_strided_slice %35 {offsets = [0, 0], sizes = [8, 128], strides = [1, 1]} : vector<8x256xf32> to vector<8x128xf32>
    %cst_14 = arith.constant 0.000000e+00 : f32
    %37 = vector.broadcast %cst_14 : f32 to vector<8x128xf32>
    %38 = arith.maximumf %36, %37 : vector<8x128xf32>
    %39 = vector.extract_strided_slice %35 {offsets = [0, 128], sizes = [8, 128], strides = [1, 1]} : vector<8x256xf32> to vector<8x128xf32>
    %40 = arith.negf %39 : vector<8x128xf32>
    %41 = math.exp %40 : vector<8x128xf32>
    %cst_15 = arith.constant 1.000000e+00 : f32
    %42 = vector.broadcast %cst_15 : f32 to vector<8x128xf32>
    %43 = arith.addf %42, %41 : vector<8x128xf32>
    %44 = arith.divf %42, %43 : vector<8x128xf32>
    %45 = arith.subf %25, %38 : vector<8x128xf32>
    %46 = arith.mulf %44, %45 : vector<8x128xf32>
    %47 = arith.addf %38, %46 : vector<8x128xf32>
    %c2_i32 = arith.constant 2 : i32
    %c0_16 = arith.constant 0 : index
    %c0_17 = arith.constant 0 : index
    %48 = vector.load %arg5[%c0_16, %c0_17] : memref<8x128xf32, #tpu.memory_space<vmem>>, vector<8x128xf32>
    tpu.vector_store %arg5[%c0_16, %c0_17], %47 {strides = array<i32>} : memref<8x128xf32, #tpu.memory_space<vmem>>, vector<8x128xf32>,
    return
  }
  func.func @transform_0(%arg0: i32, %arg1: i32) -> (i32, i32) {
    %c0_i32 = arith.constant 0 : i32
    %c0_i32_0 = arith.constant 0 : i32
    return %arg0, %c0_i32 : i32, i32
  }
  func.func @transform_1(%arg0: i32, %arg1: i32) -> (i32, i32, i32) {
    %c0_i32 = arith.constant 0 : i32
    %c0_i32_0 = arith.constant 0 : i32
    %c0_i32_1 = arith.constant 0 : i32
    return %arg1, %c0_i32, %c0_i32_0 : i32, i32, i32
  }
  func.func @transform_2(%arg0: i32, %arg1: i32) -> (i32, i32, i32) {
    %c0_i32 = arith.constant 0 : i32
    %c0_i32_0 = arith.constant 0 : i32
    %c0_i32_1 = arith.constant 0 : i32
    return %arg1, %c0_i32, %c0_i32_0 : i32, i32, i32
  }
  func.func @transform_3(%arg0: i32, %arg1: i32) -> (i32, i32) {
    %c0_i32 = arith.constant 0 : i32
    %c0_i32_0 = arith.constant 0 : i32
    return %arg0, %c0_i32 : i32, i32
  }
}

</mosaic_0001>

<llo_original>
// kernel: tpu_custom_call.1
$region0: #{tpu_custom_call.1}
  #allocation0 [shape = 'u32[]', space=smem, size = 0x4, offset = 0x4, fixed_abs, tag = 'smem constant byte address 0x4 - core index']
  #allocation1 [shape = 'u32[144,128]{1,0:T(1,128)}', space=vmem, size = 0x12000, scoped, tag = 'internal scratch']
  %s0 = inlined_call_operand.hbm [shape: f32[8,128], index: 0, kind: input, shape index: {}]
  %s1 = inlined_call_operand.hbm [shape: bf16[2,128,256], index: 1, kind: input, shape index: {}]
  %s2 = inlined_call_operand.vmem [shape: f32[2,1,256], index: 2, kind: input, shape index: {}]
  %s3 = inlined_call_operand.hbm [shape: f32[8,128], index: 3, kind: output, shape index: {}]
  %s4 = sld [smem:[#allocation0]]
  $region34: #{tpu_custom_call.1} parent=0
    _
  %s6 = ssub.s32 1, %s4
  %s7 = scalar_select 0, %s6, %s4
  $region1: #{tpu_custom_call.1} parent=0
    #allocation2 [shape = 'u8[4096]{0}', space=vmem, size = 0x1000, scoped, tag = 'input window, operand 0, single buffered']
    #allocation3 [shape = 's32[1]{0}', space=sflag, size = 0x4, scoped, tag = 'scoped memory for tpu_custom_call.1']
    #allocation4 [shape = 's32[1]{0}', space=sflag, size = 0x4, scoped, tag = 'scoped memory for tpu_custom_call.1']
    #allocation5 [shape = 'u8[131072]{0}', space=vmem, size = 0x20000, scoped, tag = 'input window, operand 1, single buffered']
    #allocation6 [shape = 's32[1]{0}', space=sflag, size = 0x4, scoped, tag = 'scoped memory for tpu_custom_call.1']
    #allocation7 [shape = 'u8[4096]{0}', space=vmem, size = 0x1000, scoped, tag = 'output window, operand 0, single buffered']
    %8 = vsyncpa [#allocation3], 0
    %9 = vsyncpa [#allocation6], 0
    %10 = vsyncpa [#allocation4], 0
    // Predicated region
    $region2: #{tpu_custom_call.1} parent=1 // pred_check
      _
    $region3: #{tpu_custom_call.1} parent=1 // pred_check_branch
      %12 = sbr.rel (0) target = $region5
    $region4: #{tpu_custom_call.1} parent=1 // pred_region
      %s14 = ssub.s32 128, 128
      %15 = vsyncadd [#allocation3], %s14
      %s17 = sshll.u32 [#allocation2], 4
      %s18 = int_to_ptr.vmem [resolvable:$true] %s17
      %20 = dma.hbm_to_vmem [thread:$0]  %s0, 128, %s18, [#allocation3]
    $region5: #{tpu_custom_call.1} parent=1 // pred_fallthru
      _
    // Predicated region
    $region6: #{tpu_custom_call.1} parent=1 // pred_check
      _
    $region7: #{tpu_custom_call.1} parent=1 // pred_check_branch
      %22 = sbr.rel (0) target = $region9
    $region8: #{tpu_custom_call.1} parent=1 // pred_region
      %s24 = ssub.s32 4096, 4096
      %25 = vsyncadd [#allocation6], %s24
      %s26 = sshll.u32 [#allocation5], 4
      %s27 = int_to_ptr.vmem [resolvable:$true] %s26
      %32 = dma.hbm_to_vmem [thread:$0]  %s1, 4096, %s27, [#allocation6], 128, 128, 8
    $region9: #{tpu_custom_call.1} parent=1 // pred_fallthru
      _
    // Predicated region
    $region10: #{tpu_custom_call.1} parent=1 // pred_check
      _
    $region11: #{tpu_custom_call.1} parent=1 // pred_check_branch
      %34 = sbr.rel (0) target = $region13
    $region12: #{tpu_custom_call.1} parent=1 // pred_region
      _
    $region13: #{tpu_custom_call.1} parent=1 // pred_fallthru
      _
    // Predicated region
    $region14: #{tpu_custom_call.1} parent=1 // pred_check
      _
    $region15: #{tpu_custom_call.1} parent=1 // pred_check_branch
      %36 = sbr.rel (0) target = $region17
    $region16: #{tpu_custom_call.1} parent=1 // pred_region
      %37 = dma.done [#allocation3], 128
    $region17: #{tpu_custom_call.1} parent=1 // pred_fallthru
      _
    // Predicated region
    $region18: #{tpu_custom_call.1} parent=1 // pred_check
      _
    $region19: #{tpu_custom_call.1} parent=1 // pred_check_branch
      %39 = sbr.rel (0) target = $region21
    $region20: #{tpu_custom_call.1} parent=1 // pred_region
      %40 = dma.done [#allocation6], 4096
    $region21: #{tpu_custom_call.1} parent=1 // pred_fallthru
      _
    %p42 = scmp.eq.s32.totalorder 0, 0
    // Predicated region
    $region22: #{tpu_custom_call.1} parent=1 // pred_check
      %p43 = pneg %p42
    $region23: #{tpu_custom_call.1} parent=1 // pred_check_branch
      %45 = sbr.rel (%p43) target = $region25
    $region24: #{tpu_custom_call.1} parent=1 // pred_region
      %v46 = vld [vmem:[#allocation2] sm:$0xff]
      %47 = vst [vmem:[#allocation7] sm:$0xff] %v46
    $region25: #{tpu_custom_call.1} parent=1 // pred_fallthru
      _
    %v48 = vld [vmem:[#allocation7] sm:$0xff]
    %v49 = vpack.c.bf16 %v48, %v48
    %v50 = vld [vmem:[#allocation5] sm:$0xff]
    %v51 = vld [vmem:[#allocation5 + $0x8] sm:$0xff]
    %v52 = vld [vmem:[#allocation5 + $0x10] sm:$0xff]
    %v53 = vld [vmem:[#allocation5 + $0x18] sm:$0xff]
    %v54 = vld [vmem:[#allocation5 + $0x20] sm:$0xff]
    %v55 = vld [vmem:[#allocation5 + $0x28] sm:$0xff]
    %v56 = vld [vmem:[#allocation5 + $0x30] sm:$0xff]
    %v57 = vld [vmem:[#allocation5 + $0x38] sm:$0xff]
    %v58 = vld [vmem:[#allocation5 + $0x40] sm:$0xff]
    %v59 = vld [vmem:[#allocation5 + $0x48] sm:$0xff]
    %v60 = vld [vmem:[#allocation5 + $0x50] sm:$0xff]
    %v61 = vld [vmem:[#allocation5 + $0x58] sm:$0xff]
    %v62 = vld [vmem:[#allocation5 + $0x60] sm:$0xff]
    %v63 = vld [vmem:[#allocation5 + $0x68] sm:$0xff]
    %v64 = vld [vmem:[#allocation5 + $0x70] sm:$0xff]
    %v65 = vld [vmem:[#allocation5 + $0x78] sm:$0xff]
    %v66 = vld [vmem:[%s2] sm:$0x3]
    %v68 = vlaneseq
    %v69 = vshrl.u32 %v68, 7
    %v70 = vsub.s32 0, %v69
    %v71 = vrot.slane %v66, %v70
    %v72 = vlaneseq
    %v73 = vshrl.u32 %v72, 7
    %v74 = vsub.s32 1, %v73
    %v75 = vrot.slane %v66, %v74
    %v94 = vunpack.c.l.b16 %v50
    %v95 = vunpack.c.h.b16 %v50
    %v96 = vunpack.c.l.b16 %v51
    %v97 = vunpack.c.h.b16 %v51
    %v98 = vunpack.c.l.b16 %v52
    %v99 = vunpack.c.h.b16 %v52
    %v100 = vunpack.c.l.b16 %v53
    %v101 = vunpack.c.h.b16 %v53
    %v102 = vunpack.c.l.b16 %v54
    %v103 = vunpack.c.h.b16 %v54
    %v104 = vunpack.c.l.b16 %v55
    %v105 = vunpack.c.h.b16 %v55
    %v106 = vunpack.c.l.b16 %v56
    %v107 = vunpack.c.h.b16 %v56
    %v108 = vunpack.c.l.b16 %v57
    %v109 = vunpack.c.h.b16 %v57
    %v110 = vunpack.c.l.b16 %v58
    %v111 = vunpack.c.h.b16 %v58
    %v112 = vunpack.c.l.b16 %v59
    %v113 = vunpack.c.h.b16 %v59
    %v114 = vunpack.c.l.b16 %v60
    %v115 = vunpack.c.h.b16 %v60
    %v116 = vunpack.c.l.b16 %v61
    %v117 = vunpack.c.h.b16 %v61
    %v118 = vunpack.c.l.b16 %v62
    %v119 = vunpack.c.h.b16 %v62
    %v120 = vunpack.c.l.b16 %v63
    %v121 = vunpack.c.h.b16 %v63
    %v122 = vunpack.c.l.b16 %v64
    %v123 = vunpack.c.h.b16 %v64
    %v124 = vunpack.c.l.b16 %v65
    %v125 = vunpack.c.h.b16 %v65
    %v126 = vpack.c.b16 %v96, %v94
    %v127 = vpack.c.b16 %v97, %v95
    %v128 = vpack.c.b16 %v100, %v98
    %v129 = vpack.c.b16 %v101, %v99
    %v130 = vpack.c.b16 %v104, %v102
    %v131 = vpack.c.b16 %v105, %v103
    %v132 = vpack.c.b16 %v108, %v106
    %v133 = vpack.c.b16 %v109, %v107
    %v134 = vpack.c.b16 %v112, %v110
    %v135 = vpack.c.b16 %v113, %v111
    %v136 = vpack.c.b16 %v116, %v114
    %v137 = vpack.c.b16 %v117, %v115
    %v138 = vpack.c.b16 %v120, %v118
    %v139 = vpack.c.b16 %v121, %v119
    %v140 = vpack.c.b16 %v124, %v122
    %v141 = vpack.c.b16 %v125, %v123
    %158 = vmatprep.subr.bf16.mxu0 %v127
    %159 = vmatpush1.bf16.msra.mxu0 %v126
    %160 = vmatprep.subr.bf16.mxu0 %v129
    %161 = vmatpush1.bf16.msra.mxu0 %v128
    %162 = vmatprep.subr.bf16.mxu0 %v131
    %163 = vmatpush1.bf16.msra.mxu0 %v130
    %164 = vmatprep.subr.bf16.mxu0 %v133
    %165 = vmatpush1.bf16.msra.mxu0 %v132
    %166 = vmatprep.subr.bf16.mxu0 %v135
    %167 = vmatpush1.bf16.msra.mxu0 %v134
    %168 = vmatprep.subr.bf16.mxu0 %v137
    %169 = vmatpush1.bf16.msra.mxu0 %v136
    %170 = vmatprep.subr.bf16.mxu0 %v139
    %171 = vmatpush1.bf16.msra.mxu0 %v138
    %172 = vmatprep.subr.bf16.mxu0 %v141
    %173 = vmatpush1.bf16.msra.mxu0 %v140
    %174 = vmatprep.subr.bf16.mxu0 0
    %175 = vmatpush1.bf16.msra.mxu0 0
    %176 = vmatprep.subr.bf16.mxu0 0
    %177 = vmatpush1.bf16.msra.mxu0 0
    %178 = vmatprep.subr.bf16.mxu0 0
    %179 = vmatpush1.bf16.msra.mxu0 0
    %180 = vmatprep.subr.bf16.mxu0 0
    %181 = vmatpush1.bf16.msra.mxu0 0
    %182 = vmatprep.subr.bf16.mxu0 0
    %183 = vmatpush1.bf16.msra.mxu0 0
    %184 = vmatprep.subr.bf16.mxu0 0
    %185 = vmatpush1.bf16.msra.mxu0 0
    %186 = vmatprep.subr.bf16.mxu0 0
    %187 = vmatpush1.bf16.msra.mxu0 0
    %188 = vmatprep.subr.bf16.mxu0 0
    %189 = vmatpush1.bf16.msra.mxu0 0
    %190 = vmatprep.mubr.bf16.mxu0 0
    %191 = vmatmul.mubr.bf16.gmra.mrb[0].mxu0 %v49
    %v192 = vpop.f32.mrb[0].mxu0
    %v193 = vadd.f32 %v71, %v192
    %v194 = vpop.f32.mrb[0].mxu0
    %v195 = vadd.f32 %v75, %v194
    %v196 = vpop.f32.mrb[0].mxu0
    %v197 = vpop.f32.mrb[0].mxu0
    %198 = vdwg.mxu0
    %v199 = vmax.f32 %v193, 0.0
    %v200 = vxor.u32 %v195, 2147483648
    %v201 = vmul.f32 %v200, 1.442695
    %v202 = vpow.pop %v201
    %v203 = vadd.f32 %v202, 1.0
    %v204 = vrcp.pop %v203
    %v205 = vmul.f32 1.0, %v204
    %v206 = vsub.f32 %v48, %v199
    %v207 = vmul.f32 %v205, %v206
    %v208 = vadd.f32 %v199, %v207
    %v209 = vpack.c.bf16 %v208, %v208
    %s210 = scalar_lea.vmem [#allocation5], 128
    %v211 = vld [vmem:[%s210] sm:$0xff]
    %v212 = vld [vmem:[%s210 + $0x8] sm:$0xff]
    %v213 = vld [vmem:[%s210 + $0x10] sm:$0xff]
    %v214 = vld [vmem:[%s210 + $0x18] sm:$0xff]
    %v215 = vld [vmem:[%s210 + $0x20] sm:$0xff]
    %v216 = vld [vmem:[%s210 + $0x28] sm:$0xff]
    %v217 = vld [vmem:[%s210 + $0x30] sm:$0xff]
    %v218 = vld [vmem:[%s210 + $0x38] sm:$0xff]
    %v219 = vld [vmem:[%s210 + $0x40] sm:$0xff]
    %v220 = vld [vmem:[%s210 + $0x48] sm:$0xff]
    %v221 = vld [vmem:[%s210 + $0x50] sm:$0xff]
    %v222 = vld [vmem:[%s210 + $0x58] sm:$0xff]
    %v223 = vld [vmem:[%s210 + $0x60] sm:$0xff]
    %v224 = vld [vmem:[%s210 + $0x68] sm:$0xff]
    %v225 = vld [vmem:[%s210 + $0x70] sm:$0xff]
    %v226 = vld [vmem:[%s210 + $0x78] sm:$0xff]
    %s227 = scalar_lea.vmem %s2, 2
    %v228 = vld [vmem:[%s227] sm:$0x3]
    %v230 = vlaneseq
    %v231 = vshrl.u32 %v230, 7
    %v232 = vsub.s32 0, %v231
    %v233 = vrot.slane %v228, %v232
    %v234 = vlaneseq
    %v235 = vshrl.u32 %v234, 7
    %v236 = vsub.s32 1, %v235
    %v237 = vrot.slane %v228, %v236
    %v256 = vunpack.c.l.b16 %v211
    %v257 = vunpack.c.h.b16 %v211
    %v258 = vunpack.c.l.b16 %v212
    %v259 = vunpack.c.h.b16 %v212
    %v260 = vunpack.c.l.b16 %v213
    %v261 = vunpack.c.h.b16 %v213
    %v262 = vunpack.c.l.b16 %v214
    %v263 = vunpack.c.h.b16 %v214
    %v264 = vunpack.c.l.b16 %v215
    %v265 = vunpack.c.h.b16 %v215
    %v266 = vunpack.c.l.b16 %v216
    %v267 = vunpack.c.h.b16 %v216
    %v268 = vunpack.c.l.b16 %v217
    %v269 = vunpack.c.h.b16 %v217
    %v270 = vunpack.c.l.b16 %v218
    %v271 = vunpack.c.h.b16 %v218
    %v272 = vunpack.c.l.b16 %v219
    %v273 = vunpack.c.h.b16 %v219
    %v274 = vunpack.c.l.b16 %v220
    %v275 = vunpack.c.h.b16 %v220
    %v276 = vunpack.c.l.b16 %v221
    %v277 = vunpack.c.h.b16 %v221
    %v278 = vunpack.c.l.b16 %v222
    %v279 = vunpack.c.h.b16 %v222
    %v280 = vunpack.c.l.b16 %v223
    %v281 = vunpack.c.h.b16 %v223
    %v282 = vunpack.c.l.b16 %v224
    %v283 = vunpack.c.h.b16 %v224
    %v284 = vunpack.c.l.b16 %v225
    %v285 = vunpack.c.h.b16 %v225
    %v286 = vunpack.c.l.b16 %v226
    %v287 = vunpack.c.h.b16 %v226
    %v288 = vpack.c.b16 %v258, %v256
    %v289 = vpack.c.b16 %v259, %v257
    %v290 = vpack.c.b16 %v262, %v260
    %v291 = vpack.c.b16 %v263, %v261
    %v292 = vpack.c.b16 %v266, %v264
    %v293 = vpack.c.b16 %v267, %v265
    %v294 = vpack.c.b16 %v270, %v268
    %v295 = vpack.c.b16 %v271, %v269
    %v296 = vpack.c.b16 %v274, %v272
    %v297 = vpack.c.b16 %v275, %v273
    %v298 = vpack.c.b16 %v278, %v276
    %v299 = vpack.c.b16 %v279, %v277
    %v300 = vpack.c.b16 %v282, %v280
    %v301 = vpack.c.b16 %v283, %v281
    %v302 = vpack.c.b16 %v286, %v284
    %v303 = vpack.c.b16 %v287, %v285
    %320 = vmatprep.subr.bf16.mxu0 %v289
    %321 = vmatpush1.bf16.msra.mxu0 %v288
    %322 = vmatprep.subr.bf16.mxu0 %v291
    %323 = vmatpush1.bf16.msra.mxu0 %v290
    %324 = vmatprep.subr.bf16.mxu0 %v293
    %325 = vmatpush1.bf16.msra.mxu0 %v292
    %326 = vmatprep.subr.bf16.mxu0 %v295
    %327 = vmatpush1.bf16.msra.mxu0 %v294
    %328 = vmatprep.subr.bf16.mxu0 %v297
    %329 = vmatpush1.bf16.msra.mxu0 %v296
    %330 = vmatprep.subr.bf16.mxu0 %v299
    %331 = vmatpush1.bf16.msra.mxu0 %v298
    %332 = vmatprep.subr.bf16.mxu0 %v301
    %333 = vmatpush1.bf16.msra.mxu0 %v300
    %334 = vmatprep.subr.bf16.mxu0 %v303
    %335 = vmatpush1.bf16.msra.mxu0 %v302
    %336 = vmatprep.subr.bf16.mxu0 0
    %337 = vmatpush1.bf16.msra.mxu0 0
    %338 = vmatprep.subr.bf16.mxu0 0
    %339 = vmatpush1.bf16.msra.mxu0 0
    %340 = vmatprep.subr.bf16.mxu0 0
    %341 = vmatpush1.bf16.msra.mxu0 0
    %342 = vmatprep.subr.bf16.mxu0 0
    %343 = vmatpush1.bf16.msra.mxu0 0
    %344 = vmatprep.subr.bf16.mxu0 0
    %345 = vmatpush1.bf16.msra.mxu0 0
    %346 = vmatprep.subr.bf16.mxu0 0
    %347 = vmatpush1.bf16.msra.mxu0 0
    %348 = vmatprep.subr.bf16.mxu0 0
    %349 = vmatpush1.bf16.msra.mxu0 0
    %350 = vmatprep.subr.bf16.mxu0 0
    %351 = vmatpush1.bf16.msra.mxu0 0
    %352 = vmatprep.mubr.bf16.mxu0 0
    %353 = vmatmul.mubr.bf16.gmra.mrb[0].mxu0 %v209
    %v354 = vpop.f32.mrb[0].mxu0
    %v355 = vadd.f32 %v233, %v354
    %v356 = vpop.f32.mrb[0].mxu0
    %v357 = vadd.f32 %v237, %v356
    %v358 = vpop.f32.mrb[0].mxu0
    %v359 = vpop.f32.mrb[0].mxu0
    %360 = vdwg.mxu0
    %v361 = vmax.f32 %v355, 0.0
    %v362 = vxor.u32 %v357, 2147483648
    %v363 = vmul.f32 %v362, 1.442695
    %v364 = vpow.pop %v363
    %v365 = vadd.f32 %v364, 1.0
    %v366 = vrcp.pop %v365
    %v367 = vmul.f32 1.0, %v366
    %v368 = vsub.f32 %v208, %v361
    %v369 = vmul.f32 %v367, %v368
    %v370 = vadd.f32 %v361, %v369
    %371 = vst [vmem:[#allocation7] sm:$0xff] %v370
    // Predicated region
    $region26: #{tpu_custom_call.1} parent=1 // pred_check
      _
    $region27: #{tpu_custom_call.1} parent=1 // pred_check_branch
      %373 = sbr.rel (0) target = $region29
    $region28: #{tpu_custom_call.1} parent=1 // pred_region
      %s375 = ssub.s32 128, 128
      %376 = vsyncadd [#allocation4], %s375
      %s378 = sshll.u32 [#allocation7], 4
      %s379 = int_to_ptr.vmem [resolvable:$true] %s378
      %381 = dma.vmem_to_hbm [thread:$0]  %s379, 128, %s3, [#allocation4]
    $region29: #{tpu_custom_call.1} parent=1 // pred_fallthru
      _
    // Predicated region
    $region30: #{tpu_custom_call.1} parent=1 // pred_check
      _
    $region31: #{tpu_custom_call.1} parent=1 // pred_check_branch
      %383 = sbr.rel (0) target = $region33
    $region32: #{tpu_custom_call.1} parent=1 // pred_region
      %384 = dma.done [#allocation4], 128
    $region33: #{tpu_custom_call.1} parent=1 // pred_fallthru
      _
    %385 = vsyncpa [#allocation3], 1
    %386 = vsyncpa [#allocation6], 1
    %387 = vsyncpa [#allocation4], 1

</llo_original>
